<compile_context>
chip_gen: v6e
topology: v6e:2x2x1
jax: 0.10.0
libtpu: 0.0.40
codegen_flags: <defaults>
</compile_context>

<pallas_src>
import functools

import jax
import jax.numpy as jnp
from jax.experimental import pallas as pl
from jax.experimental.pallas import tpu as pltpu

_LANE = 128


def _mixed_loss_partials_kernel(x_ref, t_ref, out_ref, *, gamma, hw, tile_r,
                                needs_mask):
    """One (batch, row-tile) block -> (1, 1, 4, 128) per-lane partial sums.

    x_ref  : (1, C, tile_r, 128) logits (native dtype)
    t_ref  : (1, tile_r, 128)    int class labels
    out_ref: (1, 1, 4, 128)      f32 partials:
             row 0 = sum(focal), row 1 = sum(p*t), row 2 = sum(p), row 3 = sum(t)
    """
    x = x_ref[0].astype(jnp.float32)          # (C, tile_r, 128)
    labels = t_ref[0].astype(jnp.int32)       # (tile_r, 128)

    # One-hot along the channel axis (== torch scatter_ in to_one_hot).
    chan = jax.lax.broadcasted_iota(jnp.int32, x.shape, 0)
    t = (chan == labels[None, :, :]).astype(jnp.float32)

    # Shared transcendentals:
    #   s = log1p(exp(-|x|))  ->  softplus(-x) = max(-x, 0) + s
    s = jnp.log1p(jnp.exp(-jnp.abs(x)))
    bce = x - x * t + jnp.maximum(-x, 0.0) + s          # stable BCE-with-logits
    p = jnp.exp(jnp.minimum(x, 0.0) - s)                 # sigmoid(x), one exp

    g = float(gamma)
    if g.is_integer() and g >= 0:
        # exp(gamma * logsigmoid(-x*(2t-1))) == (p + t - 2*p*t)**gamma,
        # evaluated with VPU multiplies only (square-and-multiply).
        gi = int(g)
        if gi == 0:
            w = jnp.ones_like(x)
        else:
            base = p + t - 2.0 * p * t
            w = None
            while gi > 0:
                if gi & 1:
                    w = base if w is None else w * base
                gi >>= 1
                if gi:
                    base = base * base
    else:
        # Fractional gamma: one extra exp.  |x*(1-2t)| == |x|, so s is reused.
        z = x * (1.0 - 2.0 * t)
        w = jnp.exp(g * (jnp.minimum(z, 0.0) - s))

    focal = w * bce
    pt = p * t

    if needs_mask:
        # Zero out spatially padded positions (exact, independent of pad data).
        row = jax.lax.broadcasted_iota(jnp.int32, (tile_r, _LANE), 0)
        lane = jax.lax.broadcasted_iota(jnp.int32, (tile_r, _LANE), 1)
        pos = (pl.program_id(1) * tile_r + row) * _LANE + lane
        m = (pos < hw).astype(jnp.float32)[None, :, :]
        focal = focal * m
        pt = pt * m
        p = p * m
        t = t * m

    def lane_sum(v):
        v = jnp.sum(v, axis=0)                          # over C (vreg adds)
        return jnp.sum(v, axis=0, keepdims=True)        # over rows -> (1, 128)

    res = jnp.concatenate(
        [lane_sum(focal), lane_sum(pt), lane_sum(p), lane_sum(t)], axis=0)
    out_ref[...] = res.reshape(1, 1, 4, _LANE)


def mixed_loss(x, target, *, alpha, gamma, n_classes):
    """x: (N, C, H, W) float logits; target: (N, H, W) integer labels in [0, C)."""
    N, C, H, W = x.shape
    assert C == n_classes
    HW = H * W

    # --- choose row tiling (rows of 128 lanes) -------------------------------
    rows = -(-HW // _LANE)                               # ceil(HW / 128)
    itemsize = jnp.dtype(x.dtype).itemsize
    target_block_bytes = 512 * 1024                      # ~0.5 MiB logits / step
    max_tile_r = max(8, (target_block_bytes // (C * _LANE * itemsize)) // 8 * 8)
    if rows <= max_tile_r:
        tile_r, n_tiles = rows, 1                        # single full-extent tile
    else:
        tile_r = max_tile_r                              # multiple of 8
        n_tiles = -(-rows // tile_r)
    rows_pad = n_tiles * tile_r
    hw_pad = rows_pad * _LANE
    needs_mask = hw_pad != HW

    # --- layout in HBM (no dtype upcast of the logits) -----------------------
    x3 = x.reshape(N, C, HW)
    t2 = target.reshape(N, HW).astype(jnp.int32)
    if needs_mask:
        x3 = jnp.pad(x3, ((0, 0), (0, 0), (0, hw_pad - HW)))
        # Padded labels get class index == n_classes (one-hot of all zeros).
        t2 = jnp.pad(t2, ((0, 0), (0, hw_pad - HW)), constant_values=n_classes)
    x4 = x3.reshape(N, C, rows_pad, _LANE)
    t3 = t2.reshape(N, rows_pad, _LANE)

    kernel = functools.partial(
        _mixed_loss_partials_kernel,
        gamma=float(gamma), hw=HW, tile_r=tile_r, needs_mask=needs_mask)

    elems = N * C * hw_pad
    cost = pl.CostEstimate(
        flops=20 * elems,
        transcendentals=3 * elems,
        bytes_accessed=(x4.size * itemsize + t3.size * 4
                        + N * n_tiles * 4 * _LANE * 4),
    )

    partials = pl.pallas_call(
        kernel,
        out_shape=jax.ShapeDtypeStruct((N, n_tiles, 4, _LANE), jnp.float32),
        grid_spec=pltpu.PrefetchScalarGridSpec(
            num_scalar_prefetch=0,
            grid=(N, n_tiles),
            in_specs=[
                pl.BlockSpec((1, C, tile_r, _LANE), lambda n, t: (n, 0, t, 0)),
                pl.BlockSpec((1, tile_r, _LANE), lambda n, t: (n, t, 0)),
            ],
            out_specs=pl.BlockSpec((1, 1, 4, _LANE), lambda n, t: (n, t, 0, 0)),
        ),
        compiler_params=pltpu.CompilerParams(
            dimension_semantics=("parallel", "parallel")),
        cost_estimate=cost,
    )(x4, t3)

    sums = jnp.sum(partials, axis=(0, 1, 3))             # (4,) tiny JAX reduce
    focal_sum, pt_sum, p_sum, t_sum = sums[0], sums[1], sums[2], sums[3]
    focal_mean = focal_sum / jnp.float32(N * C * HW)
    dice = (2.0 * pt_sum + 1.0) / (p_sum + t_sum + 1.0)
    # MixedLoss.forward's final .mean() is a no-op: the value is already scalar.
    return alpha * focal_mean - jnp.log(dice)


def _mixed_loss_reference(x, target, *, alpha, gamma, n_classes):
    """Pure-JAX reference mirroring the PyTorch module."""
    x = x.astype(jnp.float32)
    t = jax.nn.one_hot(target, n_classes, axis=1, dtype=jnp.float32)  # (N,C,H,W)

    max_val = jnp.maximum(-x, 0.0)
    bce = x - x * t + max_val + jnp.log(jnp.exp(-max_val) + jnp.exp(-x - max_val))
    z = -x * (t * 2.0 - 1.0)
    invprobs = jnp.minimum(z, 0.0) - jnp.log1p(jnp.exp(-jnp.abs(z)))
    focal = jnp.mean(jnp.exp(invprobs * gamma) * bce)

    p = jax.nn.sigmoid(x).reshape(-1)
    tf = t.reshape(-1)
    dice = (2.0 * jnp.sum(p * tf) + 1.0) / (jnp.sum(p) + jnp.sum(tf) + 1.0)
    return alpha * focal - jnp.log(dice)


if __name__ == "__main__":
    key = jax.random.PRNGKey(0)
    N, C, H, W = 2, 4, 16, 16
    alpha, gamma = 10.0, 2.0

    k1, k2 = jax.random.split(key)
    x = jax.random.normal(k1, (N, C, H, W), dtype=jnp.float32)
    target = jax.random.randint(k2, (N, H, W), 0, C, dtype=jnp.int32)

    loss = mixed_loss(x, target, alpha=alpha, gamma=gamma, n_classes=C)
    loss = jax.block_until_ready(loss)

    ref = _mixed_loss_reference(x, target, alpha=alpha, gamma=gamma, n_classes=C)
    assert jnp.allclose(loss, ref, rtol=1e-4, atol=1e-5), (loss, ref)

    print("KERNEL_OK")
</pallas_src>

<mosaic_0001>
module attributes {stable_mosaic.version = 11 : i64} {
  func.func @_mixed_loss_partials_kernel(%arg0: i32, %arg1: i32, %arg2: memref<1x4x2x128xf32, #tpu.memory_space<vmem>>, %arg3: memref<1x2x128xi32, #tpu.memory_space<vmem>>, %arg4: memref<1x1x4x128xf32, #tpu.memory_space<vmem>>) attributes {dimension_semantics = [#tpu.dimension_semantics<parallel>, #tpu.dimension_semantics<parallel>], iteration_bounds = array<i64: 2, 1>, scalar_prefetch = 0 : i64, scratch_operands = 0 : i64, tpu.core_type = #tpu.core_type<tc>, window_params = [{transform_indices = @transform_0, window_bounds = array<i64: 1, 4, 2, 128>}, {transform_indices = @transform_1, window_bounds = array<i64: 1, 2, 128>}, {transform_indices = @transform_2, window_bounds = array<i64: 1, 1, 4, 128>}]} {
    %c0 = arith.constant 0 : index
    %c0_0 = arith.constant 0 : index
    %c0_1 = arith.constant 0 : index
    %c0_2 = arith.constant 0 : index
    %0 = vector.load %arg2[%c0, %c0_0, %c0_1, %c0_2] : memref<1x4x2x128xf32, #tpu.memory_space<vmem>>, vector<1x4x2x128xf32>
    %1 = vector.shape_cast %0 : vector<1x4x2x128xf32> to vector<4x2x128xf32>
    %c0_3 = arith.constant 0 : index
    %c0_4 = arith.constant 0 : index
    %c0_5 = arith.constant 0 : index
    %2 = vector.load %arg3[%c0_3, %c0_4, %c0_5] : memref<1x2x128xi32, #tpu.memory_space<vmem>>, vector<1x2x128xi32>
    %3 = vector.shape_cast %2 : vector<1x2x128xi32> to vector<2x128xi32>
    %4 = tpu.iota {dimensions = array<i32: 0>} : vector<4x2x128xi32>
    %5 = vector.shape_cast %3 : vector<2x128xi32> to vector<1x2x128xi32>
    %6 = vector.broadcast %5 : vector<1x2x128xi32> to vector<4x2x128xi32>
    %7 = arith.cmpi eq, %4, %6 : vector<4x2x128xi32>
    %8 = arith.extui %7 : vector<4x2x128xi1> to vector<4x2x128xi32>
    %9 = arith.sitofp %8 : vector<4x2x128xi32> to vector<4x2x128xf32>
    %10 = math.absf %1 : vector<4x2x128xf32>
    %cst = arith.constant 0.000000e+00 : f32
    %11 = vector.broadcast %cst : f32 to vector<4x2x128xf32>
    %12 = arith.subf %11, %10 : vector<4x2x128xf32>
    %13 = math.exp %12 : vector<4x2x128xf32>
    %14 = math.log1p %13 : vector<4x2x128xf32>
    %15 = arith.mulf %1, %9 : vector<4x2x128xf32>
    %16 = arith.subf %1, %15 : vector<4x2x128xf32>
    %cst_6 = arith.constant 0.000000e+00 : f32
    %17 = vector.broadcast %cst_6 : f32 to vector<4x2x128xf32>
    %18 = arith.subf %17, %1 : vector<4x2x128xf32>
    %cst_7 = arith.constant 0.000000e+00 : f32
    %19 = vector.broadcast %cst_7 : f32 to vector<4x2x128xf32>
    %20 = arith.maximumf %18, %19 : vector<4x2x128xf32>
    %21 = arith.addf %16, %20 : vector<4x2x128xf32>
    %22 = arith.addf %21, %14 : vector<4x2x128xf32>
    %cst_8 = arith.constant 0.000000e+00 : f32
    %23 = vector.broadcast %cst_8 : f32 to vector<4x2x128xf32>
    %24 = arith.minimumf %1, %23 : vector<4x2x128xf32>
    %25 = arith.subf %24, %14 : vector<4x2x128xf32>
    %26 = math.exp %25 : vector<4x2x128xf32>
    %27 = arith.addf %26, %9 : vector<4x2x128xf32>
    %cst_9 = arith.constant 2.000000e+00 : f32
    %28 = vector.broadcast %cst_9 : f32 to vector<4x2x128xf32>
    %29 = arith.mulf %28, %26 : vector<4x2x128xf32>
    %30 = arith.mulf %29, %9 : vector<4x2x128xf32>
    %31 = arith.subf %27, %30 : vector<4x2x128xf32>
    %32 = arith.mulf %31, %31 : vector<4x2x128xf32>
    %33 = arith.mulf %32, %22 : vector<4x2x128xf32>
    %34 = arith.mulf %26, %9 : vector<4x2x128xf32>
    %cst_10 = arith.constant dense<0.000000e+00> : vector<2x128xf32>
    %35 = vector.multi_reduction <add>, %33, %cst_10 [0] : vector<4x2x128xf32> to vector<2x128xf32>
    %cst_11 = arith.constant dense<0.000000e+00> : vector<128xf32>
    %36 = vector.multi_reduction <add>, %35, %cst_11 [0] : vector<2x128xf32> to vector<128xf32>
    %37 = vector.shape_cast %36 : vector<128xf32> to vector<1x128xf32>
    %cst_12 = arith.constant dense<0.000000e+00> : vector<2x128xf32>
    %38 = vector.multi_reduction <add>, %34, %cst_12 [0] : vector<4x2x128xf32> to vector<2x128xf32>
    %cst_13 = arith.constant dense<0.000000e+00> : vector<128xf32>
    %39 = vector.multi_reduction <add>, %38, %cst_13 [0] : vector<2x128xf32> to vector<128xf32>
    %40 = vector.shape_cast %39 : vector<128xf32> to vector<1x128xf32>
    %cst_14 = arith.constant dense<0.000000e+00> : vector<2x128xf32>
    %41 = vector.multi_reduction <add>, %26, %cst_14 [0] : vector<4x2x128xf32> to vector<2x128xf32>
    %cst_15 = arith.constant dense<0.000000e+00> : vector<128xf32>
    %42 = vector.multi_reduction <add>, %41, %cst_15 [0] : vector<2x128xf32> to vector<128xf32>
    %43 = vector.shape_cast %42 : vector<128xf32> to vector<1x128xf32>
    %cst_16 = arith.constant dense<0.000000e+00> : vector<2x128xf32>
    %44 = vector.multi_reduction <add>, %9, %cst_16 [0] : vector<4x2x128xf32> to vector<2x128xf32>
    %cst_17 = arith.constant dense<0.000000e+00> : vector<128xf32>
    %45 = vector.multi_reduction <add>, %44, %cst_17 [0] : vector<2x128xf32> to vector<128xf32>
    %46 = vector.shape_cast %45 : vector<128xf32> to vector<1x128xf32>
    %47 = tpu.concatenate %37, %40, %43, %46 in 0 : vector<1x128xf32>, vector<1x128xf32>, vector<1x128xf32>, vector<1x128xf32> -> vector<4x128xf32>
    %48 = vector.shape_cast %47 : vector<4x128xf32> to vector<1x1x4x128xf32>
    %c0_18 = arith.constant 0 : index
    %c0_19 = arith.constant 0 : index
    %c0_20 = arith.constant 0 : index
    %c0_21 = arith.constant 0 : index
    %49 = vector.load %arg4[%c0_18, %c0_19, %c0_20, %c0_21] : memref<1x1x4x128xf32, #tpu.memory_space<vmem>>, vector<1x1x4x128xf32>
    tpu.vector_store %arg4[%c0_18, %c0_19, %c0_20, %c0_21], %48 {strides = array<i32>} : memref<1x1x4x128xf32, #tpu.memory_space<vmem>>, vector<1x1x4x128xf32>,
    return
  }
  func.func @transform_0(%arg0: i32, %arg1: i32) -> (i32, i32, i32, i32) {
    %c0_i32 = arith.constant 0 : i32
    %c0_i32_0 = arith.constant 0 : i32
    %c0_i32_1 = arith.constant 0 : i32
    return %arg0, %c0_i32, %arg1, %c0_i32_0 : i32, i32, i32, i32
  }
  func.func @transform_1(%arg0: i32, %arg1: i32) -> (i32, i32, i32) {
    %c0_i32 = arith.constant 0 : i32
    %c0_i32_0 = arith.constant 0 : i32
    return %arg0, %arg1, %c0_i32 : i32, i32, i32
  }
  func.func @transform_2(%arg0: i32, %arg1: i32) -> (i32, i32, i32, i32) {
    %c0_i32 = arith.constant 0 : i32
    %c0_i32_0 = arith.constant 0 : i32
    %c0_i32_1 = arith.constant 0 : i32
    return %arg0, %arg1, %c0_i32, %c0_i32_0 : i32, i32, i32, i32
  }
}

</mosaic_0001>

<llo_original>
// kernel: tpu_custom_call.1
$region0: #{tpu_custom_call.1}
  #allocation0 [shape = 'u32[]', space=smem, size = 0x4, offset = 0x4, fixed_abs, tag = 'smem constant byte address 0x4 - core index']
  #allocation1 [shape = 'u32[144,128]{1,0:T(1,128)}', space=vmem, size = 0x12000, scoped, tag = 'internal scratch']
  %s0 = inlined_call_operand.hbm [shape: f32[2,4,2,128], index: 0, kind: input, shape index: {}]
  %s1 = inlined_call_operand.hbm [shape: s32[2,2,128], index: 1, kind: input, shape index: {}]
  %s2 = inlined_call_operand.hbm [shape: f32[2,1,4,128], index: 2, kind: output, shape index: {}]
  %s3 = sld [smem:[#allocation0]]
  $region49: #{tpu_custom_call.1} parent=0
    _
  %s5 = ssub.s32 1, %s3
  %s6 = scalar_select 0, %s5, %s3
  $region1: #{tpu_custom_call.1} parent=0
    #allocation2 [shape = 'u8[8192]{0}', space=vmem, size = 0x2000, scoped, tag = 'input window, operand 0']
    #allocation3 [shape = 's32[2]{0}', space=sflag, size = 0x8, scoped, tag = 'scoped memory for tpu_custom_call.1']
    #allocation4 [shape = 's32[2]{0}', space=sflag, size = 0x8, scoped, tag = 'scoped memory for tpu_custom_call.1']
    #allocation5 [shape = 'u8[2048]{0}', space=vmem, size = 0x800, scoped, tag = 'input window, operand 1']
    #allocation6 [shape = 's32[2]{0}', space=sflag, size = 0x8, scoped, tag = 'scoped memory for tpu_custom_call.1']
    #allocation7 [shape = 'u8[4096]{0}', space=vmem, size = 0x1000, scoped, tag = 'output window, operand 0']
    %7 = vsyncpa [#allocation3], 0
    %s8 = scalar_lea.sflag [#allocation3], 1
    %9 = vsyncpa %s8, 0
    %10 = vsyncpa [#allocation6], 0
    %s11 = scalar_lea.sflag [#allocation6], 1
    %12 = vsyncpa %s11, 0
    %13 = vsyncpa [#allocation4], 0
    %s14 = scalar_lea.sflag [#allocation4], 1
    %15 = vsyncpa %s14, 0
    loop: start=0, step=1, limit=4
    $region2: #{tpu_custom_call.1} parent=1 // loop_pre_header
      _
    $region3: #{tpu_custom_call.1} parent=1 // loop_header
      %s17 = sphi 0, %s21
      %p18 = scmp.ge.s32.totalorder %s17, 4
      %s24 = sphi 0, %s36
      %s25 = sphi 0, %s32
      %s26 = sphi 0, %s24
      %s27 = sphi 0, %s25
      %s28 = sphi 0, %s26
      %s29 = sphi 0, %s27
      %s41 = sphi 0, %s43
      %s44 = sphi 0, %s41
      %s45 = sphi 0, %s44
      %s61 = sphi 0, %s45
      %s69 = sphi 0, %s71
      %s72 = sphi 0, %s69
      %s73 = sphi 0, %s72
      %s89 = sphi 0, %s73
      %s97 = sphi 0, %s99
      %s100 = sphi 0, %s97
      %s101 = sphi 0, %s100
      %s117 = sphi 0, %s101
    $region4: #{tpu_custom_call.1} parent=1 // loop_header_branch
      %20 = sbr.rel (%p18) target = $region8
    $region5: #{tpu_custom_call.1} parent=1 // loop_body
      %s22 = ssub.s32 %s17, 1
      %s23 = ssub.s32 %s17, 2
      %s30 = sadd.s32 1, %s25
      %p31 = scmp.ge.s32.totalorder %s30, 1
      %s32 = scalar_select %p31, 0, %s30
      %s33 = sadd.s32 1, %s24
      %s34 = scalar_select %p31, %s33, %s24
      %p35 = scmp.ge.s32.totalorder %s34, 2
      %s36 = scalar_select %p35, 0, %s34
      %s37 = ssub.s32 %s24, %s36
      %s38 = ssub.s32 %s25, %s32
      %s39 = sor.u32 %s37, %s38
      %p40 = scmp.eq.s32.totalorder %s39, 0
      %s42 = sadd.s32 %s41, 1
      %s43 = scalar_select %p40, %s41, %s42
      %p46 = pneg %p40
      %p47 = scmp.eq.s32.totalorder %s17, 1
      %p48 = por %p46, %p47
      %p49 = scmp.ne.s32.totalorder %s41, %s44
      %p50 = scmp.eq.s32.totalorder %s17, 0
      %p51 = por %p49, %p50
      %p52 = scmp.ne.s32.totalorder %s41, %s44
      %p53 = scmp.eq.s32.totalorder %s22, 1
      %p54 = por %p52, %p53
      %p55 = scmp.ne.s32.totalorder %s44, %s45
      %p56 = scmp.eq.s32.totalorder %s22, 0
      %p57 = por %p55, %p56
      %p58 = scmp.ne.s32.totalorder %s44, %s45
      %p59 = scmp.eq.s32.totalorder %s23, 1
      %p60 = por %p58, %p59
      %p62 = scmp.ne.s32.totalorder %s45, %s61
      %p63 = scmp.eq.s32.totalorder %s23, 0
      %p64 = por %p62, %p63
      %s65 = ssub.s32 %s24, %s36
      %s66 = ssub.s32 %s25, %s32
      %s67 = sor.u32 %s65, %s66
      %p68 = scmp.eq.s32.totalorder %s67, 0
      %s70 = sadd.s32 %s69, 1
      %s71 = scalar_select %p68, %s69, %s70
      %p74 = pneg %p68
      %p75 = scmp.eq.s32.totalorder %s17, 1
      %p76 = por %p74, %p75
      %p77 = scmp.ne.s32.totalorder %s69, %s72
      %p78 = scmp.eq.s32.totalorder %s17, 0
      %p79 = por %p77, %p78
      %p80 = scmp.ne.s32.totalorder %s69, %s72
      %p81 = scmp.eq.s32.totalorder %s22, 1
      %p82 = por %p80, %p81
      %p83 = scmp.ne.s32.totalorder %s72, %s73
      %p84 = scmp.eq.s32.totalorder %s22, 0
      %p85 = por %p83, %p84
      %p86 = scmp.ne.s32.totalorder %s72, %s73
      %p87 = scmp.eq.s32.totalorder %s23, 1
      %p88 = por %p86, %p87
      %p90 = scmp.ne.s32.totalorder %s73, %s89
      %p91 = scmp.eq.s32.totalorder %s23, 0
      %p92 = por %p90, %p91
      %s93 = ssub.s32 %s24, %s36
      %s94 = ssub.s32 %s25, %s32
      %s95 = sor.u32 %s93, %s94
      %p96 = scmp.eq.s32.totalorder %s95, 0
      %s98 = sadd.s32 %s97, 1
      %s99 = scalar_select %p96, %s97, %s98
      %p102 = pneg %p96
      %p103 = scmp.eq.s32.totalorder %s17, 1
      %p104 = por %p102, %p103
      %p105 = scmp.ne.s32.totalorder %s97, %s100
      %p106 = scmp.eq.s32.totalorder %s17, 0
      %p107 = por %p105, %p106
      %p108 = scmp.ne.s32.totalorder %s97, %s100
      %p109 = scmp.eq.s32.totalorder %s22, 1
      %p110 = por %p108, %p109
      %p111 = scmp.ne.s32.totalorder %s100, %s101
      %p112 = scmp.eq.s32.totalorder %s22, 0
      %p113 = por %p111, %p112
      %p114 = scmp.ne.s32.totalorder %s100, %s101
      %p115 = scmp.eq.s32.totalorder %s23, 1
      %p116 = por %p114, %p115
      %p118 = scmp.ne.s32.totalorder %s101, %s117
      %p119 = scmp.eq.s32.totalorder %s23, 0
      %p120 = por %p118, %p119
      %p121 = scmp.le.s32.totalorder 1, %s17
      %p122 = scmp.lt.s32.totalorder %s17, 3
      %p123 = pnand %p121, %p122
      %p124 = pneg %p123
      // Predicated region
      $region9: #{tpu_custom_call.1} parent=5 // pred_check
        _
      $region10: #{tpu_custom_call.1} parent=5 // pred_check_branch
        %126 = sbr.rel (%p123) target = $region12
      $region11: #{tpu_custom_call.1} parent=5 // pred_region
        %s127 = ssub.s32 %s17, 1
      $region12: #{tpu_custom_call.1} parent=5 // pred_fallthru
        _
      %p128 = scmp.lt.s32.totalorder %s17, 2
      // Predicated region
      $region13: #{tpu_custom_call.1} parent=5 // pred_check
        %p129 = pneg %p128
      $region14: #{tpu_custom_call.1} parent=5 // pred_check_branch
        %131 = sbr.rel (%p129) target = $region16
      $region15: #{tpu_custom_call.1} parent=5 // pred_region
        // Predicated region
        $region17: #{tpu_custom_call.1} parent=15 // pred_check
          %p132 = pneg %p51
        $region18: #{tpu_custom_call.1} parent=15 // pred_check_branch
          %134 = sbr.rel (%p132) target = $region20
        $region19: #{tpu_custom_call.1} parent=15 // pred_region
          %s135 = sand.u32 %s41, 1
          %s136 = scalar_lea.sflag [#allocation3], %s135
          %s137 = sand.u32 %s41, 1
          %s138 = smul.addr %s137, 8
          %s139 = scalar_lea.vmem [#allocation2], %s138
          %s141 = ssub.s32 128, 128
          %142 = vsyncadd %s136, %s141
          %s143 = smul.addr %s24, 4
          %s144 = sadd.s32 %s25, %s143
          %s145 = smul.addr %s144, 32
          %s146 = scalar_lea.hbm %s0, %s145
          %s147 = sshll.u32 %s139, 4
          %s148 = int_to_ptr.vmem [resolvable:$true] %s147
          %153 = dma.hbm_to_vmem [thread:$0]  %s146, 128, %s148, %s136, 32, 32, 2
        $region20: #{tpu_custom_call.1} parent=15 // pred_fallthru
          _
        // Predicated region
        $region21: #{tpu_custom_call.1} parent=15 // pred_check
          %p154 = pneg %p79
        $region22: #{tpu_custom_call.1} parent=15 // pred_check_branch
          %156 = sbr.rel (%p154) target = $region24
        $region23: #{tpu_custom_call.1} parent=15 // pred_region
          %s157 = sand.u32 %s69, 1
          %s158 = scalar_lea.sflag [#allocation6], %s157
          %s159 = sand.u32 %s69, 1
          %s160 = smul.addr %s159, 2
          %s161 = scalar_lea.vmem [#allocation5], %s160
          %s163 = ssub.s32 32, 32
          %164 = vsyncadd %s158, %s163
          %s165 = sadd.s32 %s25, %s24
          %s166 = smul.addr %s165, 32
          %s167 = scalar_lea.hbm %s1, %s166
          %s169 = sshll.u32 %s161, 4
          %s170 = int_to_ptr.vmem [resolvable:$true] %s169
          %172 = dma.hbm_to_vmem [thread:$0]  %s167, 32, %s170, %s158
        $region24: #{tpu_custom_call.1} parent=15 // pred_fallthru
          _
      $region16: #{tpu_custom_call.1} parent=5 // pred_fallthru
        _
      %p173 = scmp.le.s32.totalorder 1, %s17
      %p174 = scmp.lt.s32.totalorder %s17, 3
      %p175 = pnand %p173, %p174
      %p176 = pneg %p175
      // Predicated region
      $region25: #{tpu_custom_call.1} parent=5 // pred_check
        _
      $region26: #{tpu_custom_call.1} parent=5 // pred_check_branch
        %178 = sbr.rel (%p175) target = $region28
      $region27: #{tpu_custom_call.1} parent=5 // pred_region
        %s179 = ssub.s32 %s17, 1
        %s180 = sand.u32 %s44, 1
        %s181 = scalar_lea.sflag [#allocation3], %s180
        %s182 = sand.u32 %s44, 1
        %s183 = smul.addr %s182, 8
        %s184 = scalar_lea.vmem [#allocation2], %s183
        // Predicated region
        $region29: #{tpu_custom_call.1} parent=27 // pred_check
          %p185 = pneg %p57
        $region30: #{tpu_custom_call.1} parent=27 // pred_check_branch
          %187 = sbr.rel (%p185) target = $region32
        $region31: #{tpu_custom_call.1} parent=27 // pred_region
          %188 = dma.done %s181, 128
        $region32: #{tpu_custom_call.1} parent=27 // pred_fallthru
          _
        %s189 = sand.u32 %s72, 1
        %s190 = scalar_lea.sflag [#allocation6], %s189
        %s191 = sand.u32 %s72, 1
        %s192 = smul.addr %s191, 2
        %s193 = scalar_lea.vmem [#allocation5], %s192
        // Predicated region
        $region33: #{tpu_custom_call.1} parent=27 // pred_check
          %p194 = pneg %p85
        $region34: #{tpu_custom_call.1} parent=27 // pred_check_branch
          %196 = sbr.rel (%p194) target = $region36
        $region35: #{tpu_custom_call.1} parent=27 // pred_region
          %197 = dma.done %s190, 32
        $region36: #{tpu_custom_call.1} parent=27 // pred_fallthru
          _
        %s198 = sand.u32 %s44, 1
        %s199 = scalar_lea.sflag [#allocation3], %s198
        %s200 = sand.u32 %s44, 1
        %s201 = smul.addr %s200, 8
        %s202 = scalar_lea.vmem [#allocation2], %s201
        %p203 = pneg %p57
        %p204 = pneg %p54
        %s205 = sand.u32 %s72, 1
        %s206 = scalar_lea.sflag [#allocation6], %s205
        %s207 = sand.u32 %s72, 1
        %s208 = smul.addr %s207, 2
        %s209 = scalar_lea.vmem [#allocation5], %s208
        %p210 = pneg %p85
        %p211 = pneg %p82
        %p212 = pneg %p113
        %p213 = pneg %p110
        %s214 = sand.u32 %s100, 1
        %s215 = scalar_lea.sflag [#allocation4], %s214
        %s216 = sand.u32 %s100, 1
        %s217 = smul.addr %s216, 4
        %s218 = scalar_lea.vmem [#allocation7], %s217
        %v219 = vld [vmem:[%s184] sm:$0x3]
        %v220 = vld [vmem:[%s184 + $0x2] sm:$0x3]
        %v221 = vld [vmem:[%s184 + $0x4] sm:$0x3]
        %v222 = vld [vmem:[%s184 + $0x6] sm:$0x3]
        %v223 = vld [vmem:[%s193] sm:$0x3]
        %vm224 = vcmp.eq.s32.totalorder %v223, 0
        %vm225 = vcmp.eq.s32.totalorder %v223, 1
        %vm226 = vcmp.eq.s32.totalorder %v223, 2
        %vm227 = vcmp.eq.s32.totalorder %v223, 3
        %v228 = vsel %vm224, 1, 0
        %v229 = vsel %vm225, 1, 0
        %v230 = vsel %vm226, 1, 0
        %v231 = vsel %vm227, 1, 0
        %v232 = vcvt.s32.f32 %v228
        %v233 = vcvt.s32.f32 %v229
        %v234 = vcvt.s32.f32 %v230
        %v235 = vcvt.s32.f32 %v231
        %v236 = vand.u32 2147483647, %v219
        %v237 = vand.u32 2147483647, %v220
        %v238 = vand.u32 2147483647, %v221
        %v239 = vand.u32 2147483647, %v222
        %v240 = vsub.f32 0.0, %v236
        %v241 = vsub.f32 0.0, %v237
        %v242 = vsub.f32 0.0, %v238
        %v243 = vsub.f32 0.0, %v239
        %v244 = vmul.f32 %v240, 1.442695
        %v245 = vpow.pop %v244
        %v246 = vmul.f32 %v241, 1.442695
        %v247 = vpow.pop %v246
        %v248 = vmul.f32 %v242, 1.442695
        %v249 = vpow.pop %v248
        %v250 = vmul.f32 %v243, 1.442695
        %v251 = vpow.pop %v250
        %v252 = vadd.f32 %v245, 1.0
        %v253 = vlog2.pop %v252
        %v254 = vmul.f32 %v253, 0.6931472
        %v255 = vmul.f32 -0.5, %v245
        %v256 = vadd.f32 %v255, 1.0
        %v257 = vmul.f32 %v256, %v245
        %v258 = vand.u32 2147483647, %v245
        %vm259 = vcmp.lt.f32.partialorder %v258, 0.0004427343
        %v260 = vsel %vm259, %v257, %v254
        %v261 = vadd.f32 %v247, 1.0
        %v262 = vlog2.pop %v261
        %v263 = vmul.f32 %v262, 0.6931472
        %v264 = vmul.f32 -0.5, %v247
        %v265 = vadd.f32 %v264, 1.0
        %v266 = vmul.f32 %v265, %v247
        %v267 = vand.u32 2147483647, %v247
        %vm268 = vcmp.lt.f32.partialorder %v267, 0.0004427343
        %v269 = vsel %vm268, %v266, %v263
        %v270 = vadd.f32 %v249, 1.0
        %v271 = vlog2.pop %v270
        %v272 = vmul.f32 %v271, 0.6931472
        %v273 = vmul.f32 -0.5, %v249
        %v274 = vadd.f32 %v273, 1.0
        %v275 = vmul.f32 %v274, %v249
        %v276 = vand.u32 2147483647, %v249
        %vm277 = vcmp.lt.f32.partialorder %v276, 0.0004427343
        %v278 = vsel %vm277, %v275, %v272
        %v279 = vadd.f32 %v251, 1.0
        %v280 = vlog2.pop %v279
        %v281 = vmul.f32 %v280, 0.6931472
        %v282 = vmul.f32 -0.5, %v251
        %v283 = vadd.f32 %v282, 1.0
        %v284 = vmul.f32 %v283, %v251
        %v285 = vand.u32 2147483647, %v251
        %vm286 = vcmp.lt.f32.partialorder %v285, 0.0004427343
        %v287 = vsel %vm286, %v284, %v281
        %v288 = vmul.f32 %v219, %v232
        %v289 = vmul.f32 %v220, %v233
        %v290 = vmul.f32 %v221, %v234
        %v291 = vmul.f32 %v222, %v235
        %v292 = vsub.f32 %v219, %v288
        %v293 = vsub.f32 %v220, %v289
        %v294 = vsub.f32 %v221, %v290
        %v295 = vsub.f32 %v222, %v291
        %v296 = vsub.f32 0.0, %v219
        %v297 = vsub.f32 0.0, %v220
        %v298 = vsub.f32 0.0, %v221
        %v299 = vsub.f32 0.0, %v222
        %v300 = vmax.f32 %v296, 0.0
        %v301 = vmax.f32 %v297, 0.0
        %v302 = vmax.f32 %v298, 0.0
        %v303 = vmax.f32 %v299, 0.0
        %v304 = vadd.f32 %v292, %v300
        %v305 = vadd.f32 %v293, %v301
        %v306 = vadd.f32 %v294, %v302
        %v307 = vadd.f32 %v295, %v303
        %v308 = vadd.f32 %v304, %v260
        %v309 = vadd.f32 %v305, %v269
        %v310 = vadd.f32 %v306, %v278
        %v311 = vadd.f32 %v307, %v287
        %v312 = vmin.f32 %v219, 0.0
        %v313 = vmin.f32 %v220, 0.0
        %v314 = vmin.f32 %v221, 0.0
        %v315 = vmin.f32 %v222, 0.0
        %v316 = vsub.f32 %v312, %v260
        %v317 = vsub.f32 %v313, %v269
        %v318 = vsub.f32 %v314, %v278
        %v319 = vsub.f32 %v315, %v287
        %v320 = vmul.f32 %v316, 1.442695
        %v321 = vpow.pop %v320
        %v322 = vmul.f32 %v317, 1.442695
        %v323 = vpow.pop %v322
        %v324 = vmul.f32 %v318, 1.442695
        %v325 = vpow.pop %v324
        %v326 = vmul.f32 %v319, 1.442695
        %v327 = vpow.pop %v326
        %v328 = vadd.f32 %v321, %v232
        %v329 = vadd.f32 %v323, %v233
        %v330 = vadd.f32 %v325, %v234
        %v331 = vadd.f32 %v327, %v235
        %v332 = vmul.f32 %v321, 2.0
        %v333 = vmul.f32 %v323, 2.0
        %v334 = vmul.f32 %v325, 2.0
        %v335 = vmul.f32 %v327, 2.0
        %v336 = vmul.f32 %v332, %v232
        %v337 = vmul.f32 %v333, %v233
        %v338 = vmul.f32 %v334, %v234
        %v339 = vmul.f32 %v335, %v235
        %v340 = vsub.f32 %v328, %v336
        %v341 = vsub.f32 %v329, %v337
        %v342 = vsub.f32 %v330, %v338
        %v343 = vsub.f32 %v331, %v339
        %v344 = vmul.f32 %v340, %v340
        %v345 = vmul.f32 %v341, %v341
        %v346 = vmul.f32 %v342, %v342
        %v347 = vmul.f32 %v343, %v343
        %v348 = vmul.f32 %v344, %v308
        %v349 = vmul.f32 %v345, %v309
        %v350 = vmul.f32 %v346, %v310
        %v351 = vmul.f32 %v347, %v311
        %v352 = vmul.f32 %v321, %v232
        %v353 = vmul.f32 %v323, %v233
        %v354 = vmul.f32 %v325, %v234
        %v355 = vmul.f32 %v327, %v235
        %vm356 = vcmask 1041408
        %v357 = vsel %vm356, %v348, 0.0
        %v358 = vsel %vm356, %v349, 0.0
        %v359 = vadd.f32 %v357, %v358
        %v360 = vsel %vm356, %v350, 0.0
        %v361 = vadd.f32 %v359, %v360
        %v362 = vsel %vm356, %v351, 0.0
        %v363 = vadd.f32 %v361, %v362
        %v364 = vsel %vm356, %v363, 0.0
        %v365 = vrot.slane %v364, 4
        %v366 = vadd.f32 %v364, %v365
        %v367 = vrot.slane %v366, 2
        %v368 = vadd.f32 %v366, %v367
        %v369 = vrot.slane %v368, 1
        %v370 = vadd.f32 %v368, %v369
        %v371 = vsel %vm356, %v352, 0.0
        %v372 = vsel %vm356, %v353, 0.0
        %v373 = vadd.f32 %v371, %v372
        %v374 = vsel %vm356, %v354, 0.0
        %v375 = vadd.f32 %v373, %v374
        %v376 = vsel %vm356, %v355, 0.0
        %v377 = vadd.f32 %v375, %v376
        %v378 = vsel %vm356, %v377, 0.0
        %v379 = vrot.slane %v378, 4
        %v380 = vadd.f32 %v378, %v379
        %v381 = vrot.slane %v380, 2
        %v382 = vadd.f32 %v380, %v381
        %v383 = vrot.slane %v382, 1
        %v384 = vadd.f32 %v382, %v383
        %v385 = vsel %vm356, %v321, 0.0
        %v386 = vsel %vm356, %v323, 0.0
        %v387 = vadd.f32 %v385, %v386
        %v388 = vsel %vm356, %v325, 0.0
        %v389 = vadd.f32 %v387, %v388
        %v390 = vsel %vm356, %v327, 0.0
        %v391 = vadd.f32 %v389, %v390
        %v392 = vsel %vm356, %v391, 0.0
        %v393 = vrot.slane %v392, 4
        %v394 = vadd.f32 %v392, %v393
        %v395 = vrot.slane %v394, 2
        %v396 = vadd.f32 %v394, %v395
        %v397 = vrot.slane %v396, 1
        %v398 = vadd.f32 %v396, %v397
        %v399 = vsel %vm356, %v232, 0.0
        %v400 = vsel %vm356, %v233, 0.0
        %v401 = vadd.f32 %v399, %v400
        %v402 = vsel %vm356, %v234, 0.0
        %v403 = vadd.f32 %v401, %v402
        %v404 = vsel %vm356, %v235, 0.0
        %v405 = vadd.f32 %v403, %v404
        %v406 = vsel %vm356, %v405, 0.0
        %v407 = vrot.slane %v406, 4
        %v408 = vadd.f32 %v406, %v407
        %v409 = vrot.slane %v408, 2
        %v410 = vadd.f32 %v408, %v409
        %v411 = vrot.slane %v410, 1
        %v412 = vadd.f32 %v410, %v411
        %vm413 = vcmask 1040384
        %v414 = vsel %vm413, %v370, %v384
        %v415 = vsel %vm356, %v414, %v398
        %vm416 = vcmask 1042432
        %v417 = vsel %vm416, %v415, %v412
        %418 = vst [vmem:[%s218] sm:$0xf] %v417
        %s419 = sand.u32 %s100, 1
        %s420 = scalar_lea.sflag [#allocation4], %s419
        %s421 = sand.u32 %s100, 1
        %s422 = smul.addr %s421, 4
        %s423 = scalar_lea.vmem [#allocation7], %s422
        // Predicated region
        $region37: #{tpu_custom_call.1} parent=27 // pred_check
          %p424 = pneg %p110
        $region38: #{tpu_custom_call.1} parent=27 // pred_check_branch
          %426 = sbr.rel (%p424) target = $region40
        $region39: #{tpu_custom_call.1} parent=27 // pred_region
          %s428 = ssub.s32 64, 64
          %429 = vsyncadd %s420, %s428
          %s430 = sadd.s32 %s27, %s26
          %s431 = smul.addr %s430, 64
          %s432 = scalar_lea.hbm %s2, %s431
          %s434 = sshll.u32 %s423, 4
          %s435 = int_to_ptr.vmem [resolvable:$true] %s434
          %437 = dma.vmem_to_hbm [thread:$0]  %s435, 64, %s432, %s420
        $region40: #{tpu_custom_call.1} parent=27 // pred_fallthru
          _
      $region28: #{tpu_custom_call.1} parent=5 // pred_fallthru
        _
      %p438 = scmp.le.s32.totalorder 2, %s17
      // Predicated region
      $region41: #{tpu_custom_call.1} parent=5 // pred_check
        %p439 = pneg %p438
      $region42: #{tpu_custom_call.1} parent=5 // pred_check_branch
        %441 = sbr.rel (%p439) target = $region44
      $region43: #{tpu_custom_call.1} parent=5 // pred_region
        %s442 = ssub.s32 %s17, 2
        // Predicated region
        $region45: #{tpu_custom_call.1} parent=43 // pred_check
          %p443 = pneg %p116
        $region46: #{tpu_custom_call.1} parent=43 // pred_check_branch
          %445 = sbr.rel (%p443) target = $region48
        $region47: #{tpu_custom_call.1} parent=43 // pred_region
          %s446 = sand.u32 %s101, 1
          %s447 = scalar_lea.sflag [#allocation4], %s446
          %s448 = sand.u32 %s101, 1
          %s449 = smul.addr %s448, 4
          %s450 = scalar_lea.vmem [#allocation7], %s449
          %451 = dma.done %s447, 64
        $region48: #{tpu_custom_call.1} parent=43 // pred_fallthru
          _
      $region44: #{tpu_custom_call.1} parent=5 // pred_fallthru
        _
    $region6: #{tpu_custom_call.1} parent=1 // loop_footer
      %s21 = sadd.s32 1, %s17
    $region7: #{tpu_custom_call.1} parent=1 // loop_footer_branch
      %16 = sbr.rel target = $region3
    $region8: #{tpu_custom_call.1} parent=1 // loop_exit
      _
    %452 = vsyncpa [#allocation3], 1
    %s453 = scalar_lea.sflag [#allocation3], 1
    %454 = vsyncpa %s453, 1
    %455 = vsyncpa [#allocation6], 1
    %s456 = scalar_lea.sflag [#allocation6], 1
    %457 = vsyncpa %s456, 1
    %458 = vsyncpa [#allocation4], 1
    %s459 = scalar_lea.sflag [#allocation4], 1
    %460 = vsyncpa %s459, 1

</llo_original>
